<compile_context>
chip_gen: v7x
topology: tpu7x:2x2x1
jax: 0.10.0
libtpu: 0.0.40
codegen_flags: <defaults>
</compile_context>

<pallas_src>
import jax
import jax.numpy as jnp
from jax import lax
from jax.experimental import pallas as pl
from jax.experimental.pallas import tpu as pltpu


def _round_up(x, m):
    return (x + m - 1) // m * m


def _vmem_limit_bytes():
    """v7x has 64 MiB physical VMEM per TensorCore; earlier gens have 128 MiB."""
    try:
        kind = jax.devices()[0].device_kind.lower()
    except Exception:
        kind = ""
    return (32 << 20) if "v7" in kind else (64 << 20)


def _choose_batch_tile(B, D, x_itemsize, HP, HhP, requested=None, vmem_limit=None):
    """Pick the batch tile by bytes: big enough to amortize per-step overhead,
    small enough that x double-buffers + f32/bf16 hidden activations fit VMEM."""
    if vmem_limit is None:
        vmem_limit = _vmem_limit_bytes()

    # Per-row VMEM footprint inside the kernel:
    #   double-buffered x tile, its bf16 recast, h1 (f32 + bf16 recast),
    #   h2 (f32 + bf16 recast), double-buffered f32 output row.
    per_row = (2 * D * x_itemsize + 2 * D
               + HP * (4 + 2) + HhP * (4 + 2)
               + 2 * 4)
    per_row = int(per_row * 1.5)                      # fudge for compiler temporaries

    budget = max(1 << 20, vmem_limit - (8 << 20))     # headroom: weights, scratch
    tb_cap = max(16, budget // per_row)

    # Target ~2 MiB of streamed x per grid step (mem-bound regime: per-step
    # fixed cost ~0.35 us must be small vs. the tile DMA).
    tb_target = max(16, (2 << 20) // (D * x_itemsize))

    tb = min(tb_cap, tb_target)
    if requested is not None:
        tb = min(tb, max(16, int(requested)))
    tb = min(tb, _round_up(B, 16))

    # >= 2 grid steps when the batch allows it, so the "parallel" grid axis can
    # actually shard across v7x's two TensorCores.
    if B >= 32 and pl.cdiv(B, tb) < 2:
        tb = _round_up(pl.cdiv(B, 2), 16)

    # Layout rounding: multiple of 128 when large (unmasked lane-dense output
    # stores), else multiple of 16 (bf16 sublane packing).
    if tb >= 128:
        tb = (tb // 128) * 128
    else:
        tb = _round_up(tb, 16)
    return max(16, tb)


def attack_mlp_kernel(x_ref, w1_ref, b1_ref, w2_ref, b2_ref, w3_ref, b3_ref, o_ref):
    # x is streamed in its original dtype (f32); cast to bf16 on the VPU here
    # (hidden under the next tile's DMA) instead of paying an extra HBM pass.
    x = x_ref[...].astype(w1_ref.dtype)

    # Layer 1: bf16 MXU matmul, f32 accumulation, f32 bias + ReLU.
    h1 = jnp.dot(x, w1_ref[...], preferred_element_type=jnp.float32)
    h1 = jnp.maximum(h1 + b1_ref[...], 0.0)

    # Layer 2: same pattern.
    h2 = jnp.dot(h1.astype(w2_ref.dtype), w2_ref[...],
                 preferred_element_type=jnp.float32)
    h2 = jnp.maximum(h2 + b2_ref[...], 0.0)

    # Layer 3 (out_features = 1): contract the single bf16 w3 row against h2's
    # feature axis ('od,td->ot') -> lane-dense (1, tb) logit row instead of a
    # masked (tb, 1) column.
    logit = lax.dot_general(
        w3_ref[...], h2.astype(w3_ref.dtype),
        dimension_numbers=(((1,), (1,)), ((), ())),
        preferred_element_type=jnp.float32,
    ) + b3_ref[...]                                   # (1, tb) f32

    # Sigmoid epilogue in f32; the reciprocal rides the EUP slot.
    # (Use approx=False if bit-tighter sigmoid accuracy is ever required.)
    prob = pl.reciprocal(1.0 + jnp.exp(-logit), approx=True)
    o_ref[...] = prob.reshape(o_ref.shape).astype(o_ref.dtype)


def prepare_params(params, *, compute_dtype=jnp.bfloat16):
    """Pad hidden widths to the 128-lane width and cast weights ONCE.

    Hoisted out of the forward path so inference calls only run the pallas_call.
    Padded columns/rows are zero and stay inert through bias-add + ReLU.
    """
    w1, b1, w2, b2, w3, b3 = params
    D, H = w1.shape
    Hh = w2.shape[1]
    HP, HhP = _round_up(H, 128), _round_up(Hh, 128)

    w1p = jnp.zeros((D, HP), compute_dtype).at[:, :H].set(w1.astype(compute_dtype))
    b1p = jnp.zeros((1, HP), jnp.float32).at[:, :H].set(
        b1.reshape(1, H).astype(jnp.float32))
    w2p = jnp.zeros((HP, HhP), compute_dtype).at[:H, :Hh].set(w2.astype(compute_dtype))
    b2p = jnp.zeros((1, HhP), jnp.float32).at[:, :Hh].set(
        b2.reshape(1, Hh).astype(jnp.float32))
    w3p = jnp.zeros((1, HhP), compute_dtype).at[:, :Hh].set(
        w3.reshape(Hh, 1).T.astype(compute_dtype))
    b3p = b3.reshape(1, 1).astype(jnp.float32)
    return (w1p, b1p, w2p, b2p, w3p, b3p)


def attack_model_forward(x, prepared_params, *, batch_tile=None):
    """x: (B, input_dim) float32 -> (B, 1) float32 probabilities."""
    w1p, b1p, w2p, b2p, w3p, b3p = prepared_params
    B, D = x.shape
    HP = w1p.shape[1]
    HhP = w2p.shape[1]

    tb = _choose_batch_tile(B, D, jnp.dtype(x.dtype).itemsize, HP, HhP,
                            requested=batch_tile)
    # No whole-array pad: Pallas handles the partial last block (rows beyond B
    # are garbage but every row is independent, so they are simply sliced off).
    num_tiles = pl.cdiv(B, tb)

    resident = lambda shape: pl.BlockSpec(shape, lambda i: (0, 0))

    out = pl.pallas_call(
        attack_mlp_kernel,
        out_shape=jax.ShapeDtypeStruct((num_tiles, 1, tb), jnp.float32),
        grid_spec=pltpu.PrefetchScalarGridSpec(
            num_scalar_prefetch=0,
            grid=(num_tiles,),
            in_specs=[
                pl.BlockSpec((tb, D), lambda i: (i, 0)),  # x batch tile (streamed f32)
                resident((D, HP)),                        # W1 (bf16, resident)
                resident((1, HP)),                        # b1 (f32)
                resident((HP, HhP)),                      # W2 (bf16, resident)
                resident((1, HhP)),                       # b2 (f32)
                resident((1, HhP)),                       # W3 row (bf16)
                resident((1, 1)),                         # b3 (f32)
            ],
            # Lane-dense output: one (1, tb) row per grid step.
            out_specs=pl.BlockSpec((1, 1, tb), lambda i: (i, 0, 0)),
        ),
        compiler_params=pltpu.CompilerParams(
            dimension_semantics=("parallel",),            # shards across v7x's 2 TCs
            vmem_limit_bytes=_vmem_limit_bytes(),         # 64 MiB v5e/v6e, 32 MiB v7x
        ),
    )(x, w1p, b1p, w2p, b2p, w3p, b3p)

    return out.reshape(num_tiles * tb, 1)[:B]


def init_params(key, input_dim, n_hidden=50):
    """Deterministic synthetic init matching nn.Linear shapes (as (in, out) + (1, out))."""
    ks = jax.random.split(key, 6)
    n_half = n_hidden // 2

    def linear(kw, kb, fan_in, fan_out):
        # PyTorch default init: U(-1/sqrt(fan_in), 1/sqrt(fan_in))
        bound = 1.0 / jnp.sqrt(fan_in)
        w = jax.random.uniform(kw, (fan_in, fan_out), jnp.float32, -bound, bound)
        b = jax.random.uniform(kb, (1, fan_out), jnp.float32, -bound, bound)
        return w, b

    w1, b1 = linear(ks[0], ks[1], input_dim, n_hidden)
    w2, b2 = linear(ks[2], ks[3], n_hidden, n_half)
    w3, b3 = linear(ks[4], ks[5], n_half, 1)
    return (w1, b1, w2, b2, w3, b3)


def reference_forward(x, params):
    w1, b1, w2, b2, w3, b3 = params
    h1 = jnp.maximum(x @ w1 + b1, 0.0)
    h2 = jnp.maximum(h1 @ w2 + b2, 0.0)
    return jax.nn.sigmoid(h2 @ w3 + b3)


if __name__ == "__main__":
    key = jax.random.PRNGKey(0)
    k_x, k_p = jax.random.split(key)

    batch, input_dim, n_hidden = 64, 32, 50
    x = jax.random.normal(k_x, (batch, input_dim), jnp.float32)
    params = init_params(k_p, input_dim, n_hidden)
    prepared = prepare_params(params)       # hoisted: pad/cast weights once
    ref = reference_forward(x, params)

    # Auto tile: 2 grid steps of 32 rows at this batch (exercises pipelining,
    # the lane-dense tiled output and the 2-TensorCore "parallel" split).
    out = jax.block_until_ready(attack_model_forward(x, prepared))
    assert out.shape == (batch, 1)
    err = float(jnp.max(jnp.abs(out - ref)))
    assert err < 2e-2, f"auto-tile max abs err {err}"

    # Explicit small tile: 4 grid steps of 16 rows.
    out2 = jax.block_until_ready(attack_model_forward(x, prepared, batch_tile=16))
    err2 = float(jnp.max(jnp.abs(out2 - ref)))
    assert err2 < 2e-2, f"batch_tile=16 max abs err {err2}"

    print("KERNEL_OK")
</pallas_src>

<mosaic_0001>
module attributes {stable_mosaic.version = 11 : i64} {
  func.func @attack_mlp_kernel(%arg0: i32, %arg1: memref<32x32xf32, #tpu.memory_space<vmem>>, %arg2: memref<32x128xbf16, #tpu.memory_space<vmem>>, %arg3: memref<1x128xf32, #tpu.memory_space<vmem>>, %arg4: memref<128x128xbf16, #tpu.memory_space<vmem>>, %arg5: memref<1x128xf32, #tpu.memory_space<vmem>>, %arg6: memref<1x128xbf16, #tpu.memory_space<vmem>>, %arg7: memref<1x1xf32, #tpu.memory_space<vmem>>, %arg8: memref<1x1x32xf32, #tpu.memory_space<vmem>>) attributes {dimension_semantics = [#tpu.dimension_semantics<parallel>], iteration_bounds = array<i64: 2>, scalar_prefetch = 0 : i64, scratch_operands = 0 : i64, tpu.core_type = #tpu.core_type<tc>, window_params = [{transform_indices = @transform_0, window_bounds = array<i64: 32, 32>}, {pipeline_mode = #tpu.pipeline_mode<synchronous>, transform_indices = @transform_1, window_bounds = array<i64: 32, 128>}, {pipeline_mode = #tpu.pipeline_mode<synchronous>, transform_indices = @transform_2, window_bounds = array<i64: 1, 128>}, {pipeline_mode = #tpu.pipeline_mode<synchronous>, transform_indices = @transform_3, window_bounds = array<i64: 128, 128>}, {pipeline_mode = #tpu.pipeline_mode<synchronous>, transform_indices = @transform_4, window_bounds = array<i64: 1, 128>}, {pipeline_mode = #tpu.pipeline_mode<synchronous>, transform_indices = @transform_5, window_bounds = array<i64: 1, 128>}, {pipeline_mode = #tpu.pipeline_mode<synchronous>, transform_indices = @transform_6, window_bounds = array<i64: 1, 1>}, {transform_indices = @transform_7, window_bounds = array<i64: 1, 1, 32>}]} {
    %c0 = arith.constant 0 : index
    %c0_0 = arith.constant 0 : index
    %0 = vector.load %arg1[%c0, %c0_0] : memref<32x32xf32, #tpu.memory_space<vmem>>, vector<32x32xf32>
    %1 = arith.truncf %0 : vector<32x32xf32> to vector<32x32xbf16>
    %c0_1 = arith.constant 0 : index
    %c0_2 = arith.constant 0 : index
    %2 = vector.load %arg2[%c0_1, %c0_2] : memref<32x128xbf16, #tpu.memory_space<vmem>>, vector<32x128xbf16>
    %cst = arith.constant dense<0.000000e+00> : vector<32x128xf32>
    %3 = tpu.matmul %1, %2, %cst {dimension_numbers = #tpu.dot_dimension_numbers<[1], [0], [0], [1], [0, 0, 1, 1], [], []>} : vector<32x32xbf16>, vector<32x128xbf16>, vector<32x128xf32> -> vector<32x128xf32>
    %c0_3 = arith.constant 0 : index
    %c0_4 = arith.constant 0 : index
    %4 = vector.load %arg3[%c0_3, %c0_4] : memref<1x128xf32, #tpu.memory_space<vmem>>, vector<1x128xf32>
    %5 = vector.broadcast %4 : vector<1x128xf32> to vector<32x128xf32>
    %6 = arith.addf %3, %5 : vector<32x128xf32>
    %cst_5 = arith.constant 0.000000e+00 : f32
    %7 = vector.broadcast %cst_5 : f32 to vector<32x128xf32>
    %8 = arith.maximumf %6, %7 : vector<32x128xf32>
    %9 = arith.truncf %8 : vector<32x128xf32> to vector<32x128xbf16>
    %c0_6 = arith.constant 0 : index
    %c0_7 = arith.constant 0 : index
    %10 = vector.load %arg4[%c0_6, %c0_7] : memref<128x128xbf16, #tpu.memory_space<vmem>>, vector<128x128xbf16>
    %cst_8 = arith.constant dense<0.000000e+00> : vector<32x128xf32>
    %11 = tpu.matmul %9, %10, %cst_8 {dimension_numbers = #tpu.dot_dimension_numbers<[1], [0], [0], [1], [0, 0, 1, 1], [], []>} : vector<32x128xbf16>, vector<128x128xbf16>, vector<32x128xf32> -> vector<32x128xf32>
    %c0_9 = arith.constant 0 : index
    %c0_10 = arith.constant 0 : index
    %12 = vector.load %arg5[%c0_9, %c0_10] : memref<1x128xf32, #tpu.memory_space<vmem>>, vector<1x128xf32>
    %13 = vector.broadcast %12 : vector<1x128xf32> to vector<32x128xf32>
    %14 = arith.addf %11, %13 : vector<32x128xf32>
    %cst_11 = arith.constant 0.000000e+00 : f32
    %15 = vector.broadcast %cst_11 : f32 to vector<32x128xf32>
    %16 = arith.maximumf %14, %15 : vector<32x128xf32>
    %c0_12 = arith.constant 0 : index
    %c0_13 = arith.constant 0 : index
    %17 = vector.load %arg6[%c0_12, %c0_13] : memref<1x128xbf16, #tpu.memory_space<vmem>>, vector<1x128xbf16>
    %18 = arith.truncf %16 : vector<32x128xf32> to vector<32x128xbf16>
    %cst_14 = arith.constant dense<0.000000e+00> : vector<1x32xf32>
    %19 = tpu.matmul %17, %18, %cst_14 {dimension_numbers = #tpu.dot_dimension_numbers<[1], [1], [0], [0], [0, 0, 1, 0], [], []>} : vector<1x128xbf16>, vector<32x128xbf16>, vector<1x32xf32> -> vector<1x32xf32>
    %c0_15 = arith.constant 0 : index
    %c0_16 = arith.constant 0 : index
    %20 = vector.load %arg7[%c0_15, %c0_16] : memref<1x1xf32, #tpu.memory_space<vmem>>, vector<1x1xf32>
    %21 = vector.broadcast %20 : vector<1x1xf32> to vector<1x32xf32>
    %22 = arith.addf %19, %21 : vector<1x32xf32>
    %cst_17 = arith.constant 0.000000e+00 : f32
    %23 = vector.broadcast %cst_17 : f32 to vector<1x32xf32>
    %24 = arith.subf %23, %22 : vector<1x32xf32>
    %25 = math.exp %24 : vector<1x32xf32>
    %cst_18 = arith.constant 1.000000e+00 : f32
    %26 = vector.broadcast %cst_18 : f32 to vector<1x32xf32>
    %27 = arith.addf %26, %25 : vector<1x32xf32>
    %28 = tpu.reciprocal %27 {approx = true} : vector<1x32xf32> -> vector<1x32xf32>
    %29 = vector.shape_cast %28 : vector<1x32xf32> to vector<1x1x32xf32>
    %c0_19 = arith.constant 0 : index
    %c0_20 = arith.constant 0 : index
    %c0_21 = arith.constant 0 : index
    %30 = vector.load %arg8[%c0_19, %c0_20, %c0_21] : memref<1x1x32xf32, #tpu.memory_space<vmem>>, vector<1x1x32xf32>
    tpu.vector_store %arg8[%c0_19, %c0_20, %c0_21], %29 {strides = array<i32>} : memref<1x1x32xf32, #tpu.memory_space<vmem>>, vector<1x1x32xf32>,
    return
  }
  func.func @transform_0(%arg0: i32) -> (i32, i32) {
    %c0_i32 = arith.constant 0 : i32
    %c0_i32_0 = arith.constant 0 : i32
    return %arg0, %c0_i32 : i32, i32
  }
  func.func @transform_1(%arg0: i32) -> (i32, i32) {
    %c0_i32 = arith.constant 0 : i32
    %c0_i32_0 = arith.constant 0 : i32
    %c0_i32_1 = arith.constant 0 : i32
    return %c0_i32, %c0_i32_0 : i32, i32
  }
  func.func @transform_2(%arg0: i32) -> (i32, i32) {
    %c0_i32 = arith.constant 0 : i32
    %c0_i32_0 = arith.constant 0 : i32
    %c0_i32_1 = arith.constant 0 : i32
    return %c0_i32, %c0_i32_0 : i32, i32
  }
  func.func @transform_3(%arg0: i32) -> (i32, i32) {
    %c0_i32 = arith.constant 0 : i32
    %c0_i32_0 = arith.constant 0 : i32
    %c0_i32_1 = arith.constant 0 : i32
    return %c0_i32, %c0_i32_0 : i32, i32
  }
  func.func @transform_4(%arg0: i32) -> (i32, i32) {
    %c0_i32 = arith.constant 0 : i32
    %c0_i32_0 = arith.constant 0 : i32
    %c0_i32_1 = arith.constant 0 : i32
    return %c0_i32, %c0_i32_0 : i32, i32
  }
  func.func @transform_5(%arg0: i32) -> (i32, i32) {
    %c0_i32 = arith.constant 0 : i32
    %c0_i32_0 = arith.constant 0 : i32
    %c0_i32_1 = arith.constant 0 : i32
    return %c0_i32, %c0_i32_0 : i32, i32
  }
  func.func @transform_6(%arg0: i32) -> (i32, i32) {
    %c0_i32 = arith.constant 0 : i32
    %c0_i32_0 = arith.constant 0 : i32
    %c0_i32_1 = arith.constant 0 : i32
    return %c0_i32, %c0_i32_0 : i32, i32
  }
  func.func @transform_7(%arg0: i32) -> (i32, i32, i32) {
    %c0_i32 = arith.constant 0 : i32
    %c0_i32_0 = arith.constant 0 : i32
    %c0_i32_1 = arith.constant 0 : i32
    return %arg0, %c0_i32, %c0_i32_0 : i32, i32, i32
  }
}

</mosaic_0001>

<llo_original>
// kernel: tpu_custom_call.1
$region0: #{tpu_custom_call.1}
  #allocation0 [shape = 'u32[]', space=smem, size = 0x4, offset = 0x4, fixed_abs, tag = 'smem constant byte address 0x4 - core index']
  #allocation1 [shape = 'u32[144,128]{1,0:T(1,128)}', space=vmem, size = 0x12000, scoped, tag = 'internal scratch']
  #allocation2 [shape = 'f32[1,1]{1,0:T(1,128)S(1)}', space=vmem, size = 0x200, scoped, tag = 'scoped memory for tpu_custom_call.1']
  %s0 = inlined_call_operand.hbm [shape: f32[64,32], index: 0, kind: input, shape index: {}]
  %s1 = inlined_call_operand.hbm [shape: bf16[32,128], index: 1, kind: input, shape index: {}]
  %s2 = inlined_call_operand.hbm [shape: f32[1,128], index: 2, kind: input, shape index: {}]
  %s3 = inlined_call_operand.hbm [shape: bf16[128,128], index: 3, kind: input, shape index: {}]
  %s4 = inlined_call_operand.hbm [shape: f32[1,128], index: 4, kind: input, shape index: {}]
  %s5 = inlined_call_operand.hbm [shape: bf16[1,128], index: 5, kind: input, shape index: {}]
  %s6 = inlined_call_operand.<no memory space> [shape: f32[1,1], index: 6, kind: input, shape index: {}]
  %s7 = inlined_call_operand.hbm [shape: f32[2,1,32], index: 7, kind: output, shape index: {}]
  %s8 = sld [smem:[#allocation0]]
  $region85: #{tpu_custom_call.1} parent=0
    _
  %s10 = ssub.s32 1, %s8
  %s11 = scalar_select 0, %s10, %s8
  %v12 = vstv %s6
  %13 = vst [vmem:[#allocation2] sm:$0x1] %v12
  $region1: #{tpu_custom_call.1} parent=0
    #allocation3 [shape = 'u8[32768]{0}', space=vmem, size = 0x8000, scoped, tag = 'input window, operand 0']
    #allocation4 [shape = 's32[2]{0}', space=sflag, size = 0x8, scoped, tag = 'scoped memory for tpu_custom_call.1']
    #allocation5 [shape = 's32[2]{0}', space=sflag, size = 0x8, scoped, tag = 'scoped memory for tpu_custom_call.1']
    #allocation6 [shape = 'u8[8192]{0}', space=vmem, size = 0x2000, scoped, tag = 'input window, operand 1, single buffered']
    #allocation7 [shape = 's32[1]{0}', space=sflag, size = 0x4, scoped, tag = 'scoped memory for tpu_custom_call.1']
    #allocation8 [shape = 'u8[512]{0}', space=vmem, size = 0x400, scoped, tag = 'input window, operand 2, single buffered']
    #allocation9 [shape = 'u8[32768]{0}', space=vmem, size = 0x8000, scoped, tag = 'input window, operand 3, single buffered']
    #allocation10 [shape = 's32[1]{0}', space=sflag, size = 0x4, scoped, tag = 'scoped memory for tpu_custom_call.1']
    #allocation11 [shape = 'u8[512]{0}', space=vmem, size = 0x400, scoped, tag = 'input window, operand 4, single buffered']
    #allocation12 [shape = 'u8[512]{0}', space=vmem, size = 0x400, scoped, tag = 'input window, operand 5, single buffered']
    #allocation13 [shape = 's32[1]{0}', space=sflag, size = 0x4, scoped, tag = 'scoped memory for tpu_custom_call.1']
    #allocation14 [shape = 'u8[1024]{0}', space=vmem, size = 0x400, scoped, tag = 'output window, operand 0']
    %14 = vsyncpa [#allocation4], 0
    %s15 = scalar_lea.sflag [#allocation4], 1
    %16 = vsyncpa %s15, 0
    %17 = vsyncpa [#allocation7], 0
    %18 = vsyncpa [#allocation10], 0
    %19 = vsyncpa [#allocation13], 0
    %20 = vsyncpa [#allocation5], 0
    %s21 = scalar_lea.sflag [#allocation5], 1
    %22 = vsyncpa %s21, 0
    loop: start=0, step=1, limit=4
    $region2: #{tpu_custom_call.1} parent=1 // loop_pre_header
      _
    $region3: #{tpu_custom_call.1} parent=1 // loop_header
      %s24 = sphi 0, %s28
      %p25 = scmp.ge.s32.totalorder %s24, 4
      %s34 = sphi 0, %s36
      %s37 = sphi 0, %s34
      %s38 = sphi 0, %s37
      %s54 = sphi 0, %s38
      %s58 = sphi 0, %s58
      %s60 = sphi 0, %s58
      %s61 = sphi 0, %s60
      %s75 = sphi 0, %s61
      %s79 = sphi 0, %s79
      %s81 = sphi 0, %s79
      %s82 = sphi 0, %s81
      %s96 = sphi 0, %s82
      %s100 = sphi 0, %s100
      %s102 = sphi 0, %s100
      %s103 = sphi 0, %s102
      %s117 = sphi 0, %s103
      %s121 = sphi 0, %s121
      %s123 = sphi 0, %s121
      %s124 = sphi 0, %s123
      %s138 = sphi 0, %s124
      %s142 = sphi 0, %s142
      %s144 = sphi 0, %s142
      %s145 = sphi 0, %s144
      %s159 = sphi 0, %s145
      %s163 = sphi 0, %s163
      %s165 = sphi 0, %s163
      %s166 = sphi 0, %s165
      %s180 = sphi 0, %s166
      %s186 = sphi 0, %s188
      %s189 = sphi 0, %s186
      %s190 = sphi 0, %s189
      %s206 = sphi 0, %s190
    $region4: #{tpu_custom_call.1} parent=1 // loop_header_branch
      %27 = sbr.rel (%p25) target = $region8
    $region5: #{tpu_custom_call.1} parent=1 // loop_body
      %s29 = ssub.s32 %s24, 1
      %s30 = ssub.s32 %s24, 2
      %s31 = sadd.s32 %s24, 1
      %s32 = ssub.s32 %s24, %s31
      %p33 = scmp.eq.s32.totalorder %s32, 0
      %s35 = sadd.s32 %s34, 1
      %s36 = scalar_select %p33, %s34, %s35
      %p39 = pneg %p33
      %p40 = scmp.eq.s32.totalorder %s24, 1
      %p41 = por %p39, %p40
      %p42 = scmp.ne.s32.totalorder %s34, %s37
      %p43 = scmp.eq.s32.totalorder %s24, 0
      %p44 = por %p42, %p43
      %p45 = scmp.ne.s32.totalorder %s34, %s37
      %p46 = scmp.eq.s32.totalorder %s29, 1
      %p47 = por %p45, %p46
      %p48 = scmp.ne.s32.totalorder %s37, %s38
      %p49 = scmp.eq.s32.totalorder %s29, 0
      %p50 = por %p48, %p49
      %p51 = scmp.ne.s32.totalorder %s37, %s38
      %p52 = scmp.eq.s32.totalorder %s30, 1
      %p53 = por %p51, %p52
      %p55 = scmp.ne.s32.totalorder %s38, %s54
      %p56 = scmp.eq.s32.totalorder %s30, 0
      %p57 = por %p55, %p56
      %s59 = sadd.s32 %s58, 1
      %p62 = scmp.eq.s32.totalorder %s24, 1
      %p63 = scmp.ne.s32.totalorder %s58, %s60
      %p64 = scmp.eq.s32.totalorder %s24, 0
      %p65 = por %p63, %p64
      %p66 = scmp.ne.s32.totalorder %s58, %s60
      %p67 = scmp.eq.s32.totalorder %s29, 1
      %p68 = por %p66, %p67
      %p69 = scmp.ne.s32.totalorder %s60, %s61
      %p70 = scmp.eq.s32.totalorder %s29, 0
      %p71 = por %p69, %p70
      %p72 = scmp.ne.s32.totalorder %s60, %s61
      %p73 = scmp.eq.s32.totalorder %s30, 1
      %p74 = por %p72, %p73
      %p76 = scmp.ne.s32.totalorder %s61, %s75
      %p77 = scmp.eq.s32.totalorder %s30, 0
      %p78 = por %p76, %p77
      %s80 = sadd.s32 %s79, 1
      %p83 = scmp.eq.s32.totalorder %s24, 1
      %p84 = scmp.ne.s32.totalorder %s79, %s81
      %p85 = scmp.eq.s32.totalorder %s24, 0
      %p86 = por %p84, %p85
      %p87 = scmp.ne.s32.totalorder %s79, %s81
      %p88 = scmp.eq.s32.totalorder %s29, 1
      %p89 = por %p87, %p88
      %p90 = scmp.ne.s32.totalorder %s81, %s82
      %p91 = scmp.eq.s32.totalorder %s29, 0
      %p92 = por %p90, %p91
      %p93 = scmp.ne.s32.totalorder %s81, %s82
      %p94 = scmp.eq.s32.totalorder %s30, 1
      %p95 = por %p93, %p94
      %p97 = scmp.ne.s32.totalorder %s82, %s96
      %p98 = scmp.eq.s32.totalorder %s30, 0
      %p99 = por %p97, %p98
      %s101 = sadd.s32 %s100, 1
      %p104 = scmp.eq.s32.totalorder %s24, 1
      %p105 = scmp.ne.s32.totalorder %s100, %s102
      %p106 = scmp.eq.s32.totalorder %s24, 0
      %p107 = por %p105, %p106
      %p108 = scmp.ne.s32.totalorder %s100, %s102
      %p109 = scmp.eq.s32.totalorder %s29, 1
      %p110 = por %p108, %p109
      %p111 = scmp.ne.s32.totalorder %s102, %s103
      %p112 = scmp.eq.s32.totalorder %s29, 0
      %p113 = por %p111, %p112
      %p114 = scmp.ne.s32.totalorder %s102, %s103
      %p115 = scmp.eq.s32.totalorder %s30, 1
      %p116 = por %p114, %p115
      %p118 = scmp.ne.s32.totalorder %s103, %s117
      %p119 = scmp.eq.s32.totalorder %s30, 0
      %p120 = por %p118, %p119
      %s122 = sadd.s32 %s121, 1
      %p125 = scmp.eq.s32.totalorder %s24, 1
      %p126 = scmp.ne.s32.totalorder %s121, %s123
      %p127 = scmp.eq.s32.totalorder %s24, 0
      %p128 = por %p126, %p127
      %p129 = scmp.ne.s32.totalorder %s121, %s123
      %p130 = scmp.eq.s32.totalorder %s29, 1
      %p131 = por %p129, %p130
      %p132 = scmp.ne.s32.totalorder %s123, %s124
      %p133 = scmp.eq.s32.totalorder %s29, 0
      %p134 = por %p132, %p133
      %p135 = scmp.ne.s32.totalorder %s123, %s124
      %p136 = scmp.eq.s32.totalorder %s30, 1
      %p137 = por %p135, %p136
      %p139 = scmp.ne.s32.totalorder %s124, %s138
      %p140 = scmp.eq.s32.totalorder %s30, 0
      %p141 = por %p139, %p140
      %s143 = sadd.s32 %s142, 1
      %p146 = scmp.eq.s32.totalorder %s24, 1
      %p147 = scmp.ne.s32.totalorder %s142, %s144
      %p148 = scmp.eq.s32.totalorder %s24, 0
      %p149 = por %p147, %p148
      %p150 = scmp.ne.s32.totalorder %s142, %s144
      %p151 = scmp.eq.s32.totalorder %s29, 1
      %p152 = por %p150, %p151
      %p153 = scmp.ne.s32.totalorder %s144, %s145
      %p154 = scmp.eq.s32.totalorder %s29, 0
      %p155 = por %p153, %p154
      %p156 = scmp.ne.s32.totalorder %s144, %s145
      %p157 = scmp.eq.s32.totalorder %s30, 1
      %p158 = por %p156, %p157
      %p160 = scmp.ne.s32.totalorder %s145, %s159
      %p161 = scmp.eq.s32.totalorder %s30, 0
      %p162 = por %p160, %p161
      %s164 = sadd.s32 %s163, 1
      %p167 = scmp.eq.s32.totalorder %s24, 1
      %p168 = scmp.ne.s32.totalorder %s163, %s165
      %p169 = scmp.eq.s32.totalorder %s24, 0
      %p170 = por %p168, %p169
      %p171 = scmp.ne.s32.totalorder %s163, %s165
      %p172 = scmp.eq.s32.totalorder %s29, 1
      %p173 = por %p171, %p172
      %p174 = scmp.ne.s32.totalorder %s165, %s166
      %p175 = scmp.eq.s32.totalorder %s29, 0
      %p176 = por %p174, %p175
      %p177 = scmp.ne.s32.totalorder %s165, %s166
      %p178 = scmp.eq.s32.totalorder %s30, 1
      %p179 = por %p177, %p178
      %p181 = scmp.ne.s32.totalorder %s166, %s180
      %p182 = scmp.eq.s32.totalorder %s30, 0
      %p183 = por %p181, %p182
      %s184 = ssub.s32 %s24, %s31
      %p185 = scmp.eq.s32.totalorder %s184, 0
      %s187 = sadd.s32 %s186, 1
      %s188 = scalar_select %p185, %s186, %s187
      %p191 = pneg %p185
      %p192 = scmp.eq.s32.totalorder %s24, 1
      %p193 = por %p191, %p192
      %p194 = scmp.ne.s32.totalorder %s186, %s189
      %p195 = scmp.eq.s32.totalorder %s24, 0
      %p196 = por %p194, %p195
      %p197 = scmp.ne.s32.totalorder %s186, %s189
      %p198 = scmp.eq.s32.totalorder %s29, 1
      %p199 = por %p197, %p198
      %p200 = scmp.ne.s32.totalorder %s189, %s190
      %p201 = scmp.eq.s32.totalorder %s29, 0
      %p202 = por %p200, %p201
      %p203 = scmp.ne.s32.totalorder %s189, %s190
      %p204 = scmp.eq.s32.totalorder %s30, 1
      %p205 = por %p203, %p204
      %p207 = scmp.ne.s32.totalorder %s190, %s206
      %p208 = scmp.eq.s32.totalorder %s30, 0
      %p209 = por %p207, %p208
      %p210 = scmp.le.s32.totalorder 1, %s24
      %p211 = scmp.lt.s32.totalorder %s24, 3
      %p212 = pnand %p210, %p211
      %p213 = pneg %p212
      // Predicated region
      $region9: #{tpu_custom_call.1} parent=5 // pred_check
        _
      $region10: #{tpu_custom_call.1} parent=5 // pred_check_branch
        %215 = sbr.rel (%p212) target = $region12
      $region11: #{tpu_custom_call.1} parent=5 // pred_region
        %s216 = ssub.s32 %s24, 1
        // Predicated region
        $region13: #{tpu_custom_call.1} parent=11 // pred_check
          %p217 = pneg %p71
        $region14: #{tpu_custom_call.1} parent=11 // pred_check_branch
          %219 = sbr.rel (%p217) target = $region16
        $region15: #{tpu_custom_call.1} parent=11 // pred_region
          %s221 = ssub.s32 256, 256
          %222 = vsyncadd [#allocation7], %s221
          %s223 = sshll.u32 [#allocation6], 4
          %s224 = int_to_ptr.vmem [resolvable:$true] %s223
          %229 = dma.hbm_to_vmem [thread:$0]  %s1, 256, %s224, [#allocation7], 64, 64, 4
        $region16: #{tpu_custom_call.1} parent=11 // pred_fallthru
          _
        // Predicated region
        $region17: #{tpu_custom_call.1} parent=11 // pred_check
          %p230 = pneg %p92
        $region18: #{tpu_custom_call.1} parent=11 // pred_check_branch
          %232 = sbr.rel (%p230) target = $region20
        $region19: #{tpu_custom_call.1} parent=11 // pred_region
          %s234 = ssub.s32 16, 16
          %235 = vsyncadd [#allocation7], %s234
          %s237 = sshll.u32 [#allocation8], 4
          %s238 = int_to_ptr.vmem [resolvable:$true] %s237
          %240 = dma.hbm_to_vmem [thread:$0]  %s2, 16, %s238, [#allocation7]
        $region20: #{tpu_custom_call.1} parent=11 // pred_fallthru
          _
        // Predicated region
        $region21: #{tpu_custom_call.1} parent=11 // pred_check
          %p241 = pneg %p113
        $region22: #{tpu_custom_call.1} parent=11 // pred_check_branch
          %243 = sbr.rel (%p241) target = $region24
        $region23: #{tpu_custom_call.1} parent=11 // pred_region
          %s245 = ssub.s32 1024, 1024
          %246 = vsyncadd [#allocation10], %s245
          %s247 = sshll.u32 [#allocation9], 4
          %s248 = int_to_ptr.vmem [resolvable:$true] %s247
          %253 = dma.hbm_to_vmem [thread:$0]  %s3, 1024, %s248, [#allocation10], 64, 64, 4
        $region24: #{tpu_custom_call.1} parent=11 // pred_fallthru
          _
        // Predicated region
        $region25: #{tpu_custom_call.1} parent=11 // pred_check
          %p254 = pneg %p134
        $region26: #{tpu_custom_call.1} parent=11 // pred_check_branch
          %256 = sbr.rel (%p254) target = $region28
        $region27: #{tpu_custom_call.1} parent=11 // pred_region
          %s258 = ssub.s32 16, 16
          %259 = vsyncadd [#allocation10], %s258
          %s261 = sshll.u32 [#allocation11], 4
          %s262 = int_to_ptr.vmem [resolvable:$true] %s261
          %264 = dma.hbm_to_vmem [thread:$0]  %s4, 16, %s262, [#allocation10]
        $region28: #{tpu_custom_call.1} parent=11 // pred_fallthru
          _
        // Predicated region
        $region29: #{tpu_custom_call.1} parent=11 // pred_check
          %p265 = pneg %p155
        $region30: #{tpu_custom_call.1} parent=11 // pred_check_branch
          %267 = sbr.rel (%p265) target = $region32
        $region31: #{tpu_custom_call.1} parent=11 // pred_region
          %s269 = ssub.s32 16, 16
          %270 = vsyncadd [#allocation13], %s269
          %s272 = sshll.u32 [#allocation12], 4
          %s273 = int_to_ptr.vmem [resolvable:$true] %s272
          %275 = dma.hbm_to_vmem [thread:$0]  %s5, 16, %s273, [#allocation13]
        $region32: #{tpu_custom_call.1} parent=11 // pred_fallthru
          _
        // Predicated region
        $region33: #{tpu_custom_call.1} parent=11 // pred_check
          %p276 = pneg %p176
        $region34: #{tpu_custom_call.1} parent=11 // pred_check_branch
          %278 = sbr.rel (%p276) target = $region36
        $region35: #{tpu_custom_call.1} parent=11 // pred_region
          _
        $region36: #{tpu_custom_call.1} parent=11 // pred_fallthru
          _
      $region12: #{tpu_custom_call.1} parent=5 // pred_fallthru
        _
      %p279 = scmp.lt.s32.totalorder %s24, 2
      // Predicated region
      $region37: #{tpu_custom_call.1} parent=5 // pred_check
        %p280 = pneg %p279
      $region38: #{tpu_custom_call.1} parent=5 // pred_check_branch
        %282 = sbr.rel (%p280) target = $region40
      $region39: #{tpu_custom_call.1} parent=5 // pred_region
        // Predicated region
        $region41: #{tpu_custom_call.1} parent=39 // pred_check
          %p283 = pneg %p44
        $region42: #{tpu_custom_call.1} parent=39 // pred_check_branch
          %285 = sbr.rel (%p283) target = $region44
        $region43: #{tpu_custom_call.1} parent=39 // pred_region
          %s286 = sand.u32 %s34, 1
          %s287 = scalar_lea.sflag [#allocation4], %s286
          %s288 = sand.u32 %s34, 1
          %s289 = smul.addr %s288, 32
          %s290 = scalar_lea.vmem [#allocation3], %s289
          %s291 = smul.u32 4, %s24
          %s293 = ssub.s32 512, 512
          %294 = vsyncadd %s287, %s293
          %s295 = smul.addr %s291, 128
          %s296 = scalar_lea.hbm %s0, %s295
          %s297 = sshll.u32 %s290, 4
          %s298 = int_to_ptr.vmem [resolvable:$true] %s297
          %303 = dma.hbm_to_vmem [thread:$0]  %s296, 512, %s298, %s287, 128, 128, 8
        $region44: #{tpu_custom_call.1} parent=39 // pred_fallthru
          _
      $region40: #{tpu_custom_call.1} parent=5 // pred_fallthru
        _
      %p304 = scmp.le.s32.totalorder 1, %s24
      %p305 = scmp.lt.s32.totalorder %s24, 3
      %p306 = pnand %p304, %p305
      %p307 = pneg %p306
      // Predicated region
      $region45: #{tpu_custom_call.1} parent=5 // pred_check
        _
      $region46: #{tpu_custom_call.1} parent=5 // pred_check_branch
        %309 = sbr.rel (%p306) target = $region48
      $region47: #{tpu_custom_call.1} parent=5 // pred_region
        %s310 = ssub.s32 %s24, 1
        %s311 = sand.u32 %s37, 1
        %s312 = scalar_lea.sflag [#allocation4], %s311
        %s313 = sand.u32 %s37, 1
        %s314 = smul.addr %s313, 32
        %s315 = scalar_lea.vmem [#allocation3], %s314
        // Predicated region
        $region49: #{tpu_custom_call.1} parent=47 // pred_check
          %p316 = pneg %p50
        $region50: #{tpu_custom_call.1} parent=47 // pred_check_branch
          %318 = sbr.rel (%p316) target = $region52
        $region51: #{tpu_custom_call.1} parent=47 // pred_region
          %319 = dma.done %s312, 512
        $region52: #{tpu_custom_call.1} parent=47 // pred_fallthru
          _
        // Predicated region
        $region53: #{tpu_custom_call.1} parent=47 // pred_check
          %p320 = pneg %p71
        $region54: #{tpu_custom_call.1} parent=47 // pred_check_branch
          %322 = sbr.rel (%p320) target = $region56
        $region55: #{tpu_custom_call.1} parent=47 // pred_region
          %323 = dma.done [#allocation7], 256
        $region56: #{tpu_custom_call.1} parent=47 // pred_fallthru
          _
        // Predicated region
        $region57: #{tpu_custom_call.1} parent=47 // pred_check
          %p324 = pneg %p92
        $region58: #{tpu_custom_call.1} parent=47 // pred_check_branch
          %326 = sbr.rel (%p324) target = $region60
        $region59: #{tpu_custom_call.1} parent=47 // pred_region
          %327 = dma.done [#allocation7], 16
        $region60: #{tpu_custom_call.1} parent=47 // pred_fallthru
          _
        // Predicated region
        $region61: #{tpu_custom_call.1} parent=47 // pred_check
          %p328 = pneg %p113
        $region62: #{tpu_custom_call.1} parent=47 // pred_check_branch
          %330 = sbr.rel (%p328) target = $region64
        $region63: #{tpu_custom_call.1} parent=47 // pred_region
          %331 = dma.done [#allocation10], 1024
        $region64: #{tpu_custom_call.1} parent=47 // pred_fallthru
          _
        // Predicated region
        $region65: #{tpu_custom_call.1} parent=47 // pred_check
          %p332 = pneg %p134
        $region66: #{tpu_custom_call.1} parent=47 // pred_check_branch
          %334 = sbr.rel (%p332) target = $region68
        $region67: #{tpu_custom_call.1} parent=47 // pred_region
          %335 = dma.done [#allocation10], 16
        $region68: #{tpu_custom_call.1} parent=47 // pred_fallthru
          _
        // Predicated region
        $region69: #{tpu_custom_call.1} parent=47 // pred_check
          %p336 = pneg %p155
        $region70: #{tpu_custom_call.1} parent=47 // pred_check_branch
          %338 = sbr.rel (%p336) target = $region72
        $region71: #{tpu_custom_call.1} parent=47 // pred_region
          %339 = dma.done [#allocation13], 16
        $region72: #{tpu_custom_call.1} parent=47 // pred_fallthru
          _
        %s340 = sand.u32 %s37, 1
        %s341 = scalar_lea.sflag [#allocation4], %s340
        %s342 = sand.u32 %s37, 1
        %s343 = smul.addr %s342, 32
        %s344 = scalar_lea.vmem [#allocation3], %s343
        %p345 = pneg %p50
        %p346 = pneg %p47
        %p347 = pneg %p71
        %p348 = pneg %p68
        %p349 = pneg %p92
        %p350 = pneg %p89
        %p351 = pneg %p113
        %p352 = pneg %p110
        %p353 = pneg %p134
        %p354 = pneg %p131
        %p355 = pneg %p155
        %p356 = pneg %p152
        %p357 = pneg %p176
        %p358 = pneg %p173
        %p359 = pneg %p202
        %p360 = pneg %p199
        %s361 = sand.u32 %s189, 1
        %s362 = scalar_lea.sflag [#allocation5], %s361
        %s363 = sand.u32 %s189, 1
        %s364 = scalar_lea.vmem [#allocation14], %s363
        %s365 = smul.u32 4, %s29
        %v367 = vld [vmem:[%s315] sm:$0xff]
        %v368 = vld [vmem:[%s315 + $0x8] sm:$0xff]
        %v369 = vld [vmem:[%s315 + $0x10] sm:$0xff]
        %v370 = vld [vmem:[%s315 + $0x18] sm:$0xff]
        %v371 = vpack.c.bf16 %v368, %v367
        %v372 = vpack.c.bf16 %v370, %v369
        %v373 = vld [vmem:[#allocation6] sm:$0xf]
        %v374 = vld [vmem:[#allocation6 + $0x4] sm:$0xf]
        %v375 = vld [vmem:[#allocation6 + $0x8] sm:$0xf]
        %v376 = vld [vmem:[#allocation6 + $0xc] sm:$0xf]
        %v377 = vld [vmem:[#allocation8] sm:$0x1]
        %v379 = vlaneseq
        %v380 = vshrl.u32 %v379, 7
        %v381 = vsub.s32 0, %v380
        %v382 = vrot.slane %v377, %v381
        %v388 = vunpack.c.l.b16 %v373
        %v389 = vunpack.c.l.b16 %v374
        %v390 = vunpack.c.l.b16 %v375
        %v391 = vunpack.c.l.b16 %v376
        %v392 = vpack.c.b16 %v389, %v388
        %v393 = vpack.c.b16 %v391, %v390
        %vm396 = vcmask 261120
        %v398 = vsel %vm396, %v371, 0
        %v401 = vsel %vm396, %v372, 0
        %403 = vmatprep.subr.bf16.mxu0 0
        %404 = vmatpush1.bf16.msra.mxu0 %v392
        %405 = vmatprep.subr.bf16.mxu0 0
        %406 = vmatpush1.bf16.msra.mxu0 %v393
        %407 = vmatprep.subr.bf16.mxu0 0
        %408 = vmatpush1.bf16.msra.mxu0 0
        %409 = vmatprep.subr.bf16.mxu0 0
        %410 = vmatpush1.bf16.msra.mxu0 0
        %411 = vmatprep.subr.bf16.mxu0 0
        %412 = vmatpush1.bf16.msra.mxu0 0
        %413 = vmatprep.subr.bf16.mxu0 0
        %414 = vmatpush1.bf16.msra.mxu0 0
        %415 = vmatprep.subr.bf16.mxu0 0
        %416 = vmatpush1.bf16.msra.mxu0 0
        %417 = vmatprep.subr.bf16.mxu0 0
        %418 = vmatpush1.bf16.msra.mxu0 0
        %419 = vmatprep.subr.bf16.mxu0 0
        %420 = vmatpush1.bf16.msra.mxu0 0
        %421 = vmatprep.subr.bf16.mxu0 0
        %422 = vmatpush1.bf16.msra.mxu0 0
        %423 = vmatprep.subr.bf16.mxu0 0
        %424 = vmatpush1.bf16.msra.mxu0 0
        %425 = vmatprep.subr.bf16.mxu0 0
        %426 = vmatpush1.bf16.msra.mxu0 0
        %427 = vmatprep.subr.bf16.mxu0 0
        %428 = vmatpush1.bf16.msra.mxu0 0
        %429 = vmatprep.subr.bf16.mxu0 0
        %430 = vmatpush1.bf16.msra.mxu0 0
        %431 = vmatprep.subr.bf16.mxu0 0
        %432 = vmatpush1.bf16.msra.mxu0 0
        %433 = vmatprep.subr.bf16.mxu0 0
        %434 = vmatpush1.bf16.msra.mxu0 0
        %435 = vmatprep.mubr.bf16.mxu0 0
        %436 = vmatmul.mubr.bf16.gmra.mrb[0].mxu0 %v398
        %v437 = vpop.f32.mrb[0].mxu0
        %v438 = vadd.f32 %v382, %v437
        %v439 = vpop.f32.mrb[0].mxu0
        %v440 = vpop.f32.mrb[0].mxu0
        %v441 = vadd.f32 %v382, %v440
        %v442 = vpop.f32.mrb[0].mxu0
        %443 = vmatprep.mubr.bf16.mxu0 0
        %444 = vmatmul.mubr.bf16.gmra.mrb[0].mxu0 %v401
        %v445 = vpop.f32.mrb[0].mxu0
        %v446 = vadd.f32 %v382, %v445
        %v447 = vpop.f32.mrb[0].mxu0
        %v448 = vpop.f32.mrb[0].mxu0
        %v449 = vadd.f32 %v382, %v448
        %v450 = vpop.f32.mrb[0].mxu0
        %451 = vdwg.mxu0
        %v452 = vmax.f32 %v438, 0.0
        %v453 = vmax.f32 %v441, 0.0
        %v454 = vmax.f32 %v446, 0.0
        %v455 = vmax.f32 %v449, 0.0
        %v456 = vpack.c.bf16 %v453, %v452
        %v457 = vpack.c.bf16 %v455, %v454
        %v458 = vld [vmem:[#allocation9] sm:$0xf]
        %v459 = vld [vmem:[#allocation9 + $0x4] sm:$0xf]
        %v460 = vld [vmem:[#allocation9 + $0x8] sm:$0xf]
        %v461 = vld [vmem:[#allocation9 + $0xc] sm:$0xf]
        %v462 = vld [vmem:[#allocation9 + $0x10] sm:$0xf]
        %v463 = vld [vmem:[#allocation9 + $0x14] sm:$0xf]
        %v464 = vld [vmem:[#allocation9 + $0x18] sm:$0xf]
        %v465 = vld [vmem:[#allocation9 + $0x1c] sm:$0xf]
        %v466 = vld [vmem:[#allocation9 + $0x20] sm:$0xf]
        %v467 = vld [vmem:[#allocation9 + $0x24] sm:$0xf]
        %v468 = vld [vmem:[#allocation9 + $0x28] sm:$0xf]
        %v469 = vld [vmem:[#allocation9 + $0x2c] sm:$0xf]
        %v470 = vld [vmem:[#allocation9 + $0x30] sm:$0xf]
        %v471 = vld [vmem:[#allocation9 + $0x34] sm:$0xf]
        %v472 = vld [vmem:[#allocation9 + $0x38] sm:$0xf]
        %v473 = vld [vmem:[#allocation9 + $0x3c] sm:$0xf]
        %v474 = vld [vmem:[#allocation11] sm:$0x1]
        %v476 = vlaneseq
        %v477 = vshrl.u32 %v476, 7
        %v478 = vsub.s32 0, %v477
        %v479 = vrot.slane %v474, %v478
        %v497 = vunpack.c.l.b16 %v458
        %v498 = vunpack.c.l.b16 %v459
        %v499 = vunpack.c.l.b16 %v460
        %v500 = vunpack.c.l.b16 %v461
        %v501 = vunpack.c.l.b16 %v462
        %v502 = vunpack.c.l.b16 %v463
        %v503 = vunpack.c.l.b16 %v464
        %v504 = vunpack.c.l.b16 %v465
        %v505 = vunpack.c.l.b16 %v466
        %v506 = vunpack.c.l.b16 %v467
        %v507 = vunpack.c.l.b16 %v468
        %v508 = vunpack.c.l.b16 %v469
        %v509 = vunpack.c.l.b16 %v470
        %v510 = vunpack.c.l.b16 %v471
        %v511 = vunpack.c.l.b16 %v472
        %v512 = vunpack.c.l.b16 %v473
        %v513 = vpack.c.b16 %v498, %v497
        %v514 = vpack.c.b16 %v500, %v499
        %v515 = vpack.c.b16 %v502, %v501
        %v516 = vpack.c.b16 %v504, %v503
        %v517 = vpack.c.b16 %v506, %v505
        %v518 = vpack.c.b16 %v508, %v507
        %v519 = vpack.c.b16 %v510, %v509
        %v520 = vpack.c.b16 %v512, %v511
        %529 = vmatprep.subr.bf16.mxu0 0
        %530 = vmatpush1.bf16.msra.mxu0 %v513
        %531 = vmatprep.subr.bf16.mxu0 0
        %532 = vmatpush1.bf16.msra.mxu0 %v514
        %533 = vmatprep.subr.bf16.mxu0 0
        %534 = vmatpush1.bf16.msra.mxu0 %v515
        %535 = vmatprep.subr.bf16.mxu0 0
        %536 = vmatpush1.bf16.msra.mxu0 %v516
        %537 = vmatprep.subr.bf16.mxu0 0
        %538 = vmatpush1.bf16.msra.mxu0 %v517
        %539 = vmatprep.subr.bf16.mxu0 0
        %540 = vmatpush1.bf16.msra.mxu0 %v518
        %541 = vmatprep.subr.bf16.mxu0 0
        %542 = vmatpush1.bf16.msra.mxu0 %v519
        %543 = vmatprep.subr.bf16.mxu0 0
        %544 = vmatpush1.bf16.msra.mxu0 %v520
        %545 = vmatprep.subr.bf16.mxu0 0
        %546 = vmatpush1.bf16.msra.mxu0 0
        %547 = vmatprep.subr.bf16.mxu0 0
        %548 = vmatpush1.bf16.msra.mxu0 0
        %549 = vmatprep.subr.bf16.mxu0 0
        %550 = vmatpush1.bf16.msra.mxu0 0
        %551 = vmatprep.subr.bf16.mxu0 0
        %552 = vmatpush1.bf16.msra.mxu0 0
        %553 = vmatprep.subr.bf16.mxu0 0
        %554 = vmatpush1.bf16.msra.mxu0 0
        %555 = vmatprep.subr.bf16.mxu0 0
        %556 = vmatpush1.bf16.msra.mxu0 0
        %557 = vmatprep.subr.bf16.mxu0 0
        %558 = vmatpush1.bf16.msra.mxu0 0
        %559 = vmatprep.subr.bf16.mxu0 0
        %560 = vmatpush1.bf16.msra.mxu0 0
        %561 = vmatprep.mubr.bf16.mxu0 0
        %562 = vmatmul.mubr.bf16.gmra.mrb[0].mxu0 %v456
        %v563 = vpop.f32.mrb[0].mxu0
        %v564 = vadd.f32 %v479, %v563
        %v565 = vpop.f32.mrb[0].mxu0
        %v566 = vpop.f32.mrb[0].mxu0
        %v567 = vadd.f32 %v479, %v566
        %v568 = vpop.f32.mrb[0].mxu0
        %569 = vmatprep.mubr.bf16.mxu0 0
        %570 = vmatmul.mubr.bf16.gmra.mrb[0].mxu0 %v457
        %v571 = vpop.f32.mrb[0].mxu0
        %v572 = vadd.f32 %v479, %v571
        %v573 = vpop.f32.mrb[0].mxu0
        %v574 = vpop.f32.mrb[0].mxu0
        %v575 = vadd.f32 %v479, %v574
        %v576 = vpop.f32.mrb[0].mxu0
        %577 = vdwg.mxu0
        %v578 = vmax.f32 %v564, 0.0
        %v579 = vmax.f32 %v567, 0.0
        %v580 = vmax.f32 %v572, 0.0
        %v581 = vmax.f32 %v575, 0.0
        %v582 = vld [vmem:[#allocation12] sm:$0x1]
        %v583 = vpack.c.bf16 %v579, %v578
        %v584 = vpack.c.bf16 %v581, %v580
        %v585 = vld [vmem:[#allocation2] sm:$0x1]
        %587 = vset.pattern.permute.xlu0 0
        %588 = vperm.xlu0 %587, %v585
        %v589 = vpop.permute.xlu0 %588
        %v591 = vlaneseq
        %v592 = vshrl.u32 %v591, 7
        %v593 = vsub.s32 0, %v592
        %v594 = vrot.slane %v589, %v593
        %595 = vmatprep.subr.bf16.mxu0 0
        %596 = vmatpush1.bf16.xpose.msra.mxu0 %v583
        %597 = vmatprep.subr.bf16.mxu0 0
        %598 = vmatpush1.bf16.xpose.msra.mxu0 %v584
        %599 = vmatprep.subr.bf16.mxu0 0
        %600 = vmatpush1.bf16.xpose.msra.mxu0 0
        %601 = vmatprep.subr.bf16.mxu0 0
        %602 = vmatpush1.bf16.xpose.msra.mxu0 0
        %603 = vmatprep.subr.bf16.mxu0 0
        %604 = vmatpush1.bf16.xpose.msra.mxu0 0
        %605 = vmatprep.subr.bf16.mxu0 0
        %606 = vmatpush1.bf16.xpose.msra.mxu0 0
        %607 = vmatprep.subr.bf16.mxu0 0
        %608 = vmatpush1.bf16.xpose.msra.mxu0 0
        %609 = vmatprep.subr.bf16.mxu0 0
        %610 = vmatpush1.bf16.xpose.msra.mxu0 0
        %611 = vmatprep.subr.bf16.mxu0 0
        %612 = vmatpush1.bf16.xpose.msra.mxu0 0
        %613 = vmatprep.subr.bf16.mxu0 0
        %614 = vmatpush1.bf16.xpose.msra.mxu0 0
        %615 = vmatprep.subr.bf16.mxu0 0
        %616 = vmatpush1.bf16.xpose.msra.mxu0 0
        %617 = vmatprep.subr.bf16.mxu0 0
        %618 = vmatpush1.bf16.xpose.msra.mxu0 0
        %619 = vmatprep.subr.bf16.mxu0 0
        %620 = vmatpush1.bf16.xpose.msra.mxu0 0
        %621 = vmatprep.subr.bf16.mxu0 0
        %622 = vmatpush1.bf16.xpose.msra.mxu0 0
        %623 = vmatprep.subr.bf16.mxu0 0
        %624 = vmatpush1.bf16.xpose.msra.mxu0 0
        %625 = vmatprep.subr.bf16.mxu0 0
        %626 = vmatpush1.bf16.xpose.msra.mxu0 0
        %627 = vmatprep.mubr.bf16.mxu0 0
        %628 = vmatmul.mubr.bf16.gmra.mrb[0].mxu0 %v582
        %v629 = vpop.f32.mrb[0].mxu0
        %v630 = vadd.f32 %v594, %v629
        %v631 = vpop.f32.mrb[0].mxu0
        %v632 = vpop.f32.mrb[0].mxu0
        %v633 = vpop.f32.mrb[0].mxu0
        %634 = vdwg.mxu0
        %v635 = vsub.f32 0.0, %v630
        %v636 = vmul.f32 %v635, 1.442695
        %v637 = vpow.pop %v636
        %v638 = vadd.f32 %v637, 1.0
        %v639 = vrcp.pop %v638
        %vm640 = vcmask 253952
        %641 = vst.msk [vmem:[%s364] sm:$0x1] %vm640, %v639
        %s642 = sand.u32 %s189, 1
        %s643 = scalar_lea.sflag [#allocation5], %s642
        %s644 = sand.u32 %s189, 1
        %s645 = scalar_lea.vmem [#allocation14], %s644
        // Predicated region
        $region73: #{tpu_custom_call.1} parent=47 // pred_check
          %p646 = pneg %p199
        $region74: #{tpu_custom_call.1} parent=47 // pred_check_branch
          %648 = sbr.rel (%p646) target = $region76
        $region75: #{tpu_custom_call.1} parent=47 // pred_region
          %s650 = ssub.s32 16, 16
          %651 = vsyncadd %s643, %s650
          %s652 = smul.addr %s29, 16
          %s653 = scalar_lea.hbm %s7, %s652
          %s655 = sshll.u32 %s645, 4
          %s656 = int_to_ptr.vmem [resolvable:$true] %s655
          %658 = dma.vmem_to_hbm [thread:$0]  %s656, 16, %s653, %s643
        $region76: #{tpu_custom_call.1} parent=47 // pred_fallthru
          _
      $region48: #{tpu_custom_call.1} parent=5 // pred_fallthru
        _
      %p659 = scmp.le.s32.totalorder 2, %s24
      // Predicated region
      $region77: #{tpu_custom_call.1} parent=5 // pred_check
        %p660 = pneg %p659
      $region78: #{tpu_custom_call.1} parent=5 // pred_check_branch
        %662 = sbr.rel (%p660) target = $region80
      $region79: #{tpu_custom_call.1} parent=5 // pred_region
        %s663 = ssub.s32 %s24, 2
        // Predicated region
        $region81: #{tpu_custom_call.1} parent=79 // pred_check
          %p664 = pneg %p205
        $region82: #{tpu_custom_call.1} parent=79 // pred_check_branch
          %666 = sbr.rel (%p664) target = $region84
        $region83: #{tpu_custom_call.1} parent=79 // pred_region
          %s667 = sand.u32 %s190, 1
          %s668 = scalar_lea.sflag [#allocation5], %s667
          %s669 = sand.u32 %s190, 1
          %s670 = scalar_lea.vmem [#allocation14], %s669
          %671 = dma.done %s668, 16
        $region84: #{tpu_custom_call.1} parent=79 // pred_fallthru
          _
      $region80: #{tpu_custom_call.1} parent=5 // pred_fallthru
        _
    $region6: #{tpu_custom_call.1} parent=1 // loop_footer
      %s28 = sadd.s32 1, %s24
    $region7: #{tpu_custom_call.1} parent=1 // loop_footer_branch
      %23 = sbr.rel target = $region3
    $region8: #{tpu_custom_call.1} parent=1 // loop_exit
      _
    %672 = vsyncpa [#allocation4], 1
    %s673 = scalar_lea.sflag [#allocation4], 1
    %674 = vsyncpa %s673, 1
    %675 = vsyncpa [#allocation7], 1
    %676 = vsyncpa [#allocation10], 1
    %677 = vsyncpa [#allocation13], 1
    %678 = vsyncpa [#allocation5], 1
    %s679 = scalar_lea.sflag [#allocation5], 1
    %680 = vsyncpa %s679, 1

</llo_original>
